<compile_context>
chip_gen: v7x
topology: tpu7x:2x2x1
jax: 0.10.0
libtpu: 0.0.40
codegen_flags: <defaults>
</compile_context>

<pallas_src>
import jax
import jax.numpy as jnp
from jax.experimental import pallas as pl
from jax.experimental.pallas import tpu as pltpu

_LANE = 128
_QUANT = 0.0078125               # 1 / 128  (exact power of two)
_INV_QUANT = 128.0
_DEFAULT_BLOCK_BYTES = 2 << 20   # f32 output block cap, safe on v5e/v6e
_V7X_BLOCK_BYTES = 4 << 20       # larger blocks amortize per-step cost on v7x
_MIN_SPLIT_OUT_BYTES = 1 << 20   # only force a multi-step grid above this


def _quantize_exact(x_f32):
    """Literal PyTorch expression, then divisor-free floor-quantize.

    z - remainder(z, 1/128) == floor(z*128)/128 bit-for-bit for finite z
    (1/128 is a power of two, so z*128 is exact)."""
    z = -1.0 + 2.0 * x_f32 / 255.0
    return jnp.floor(z * _INV_QUANT) * _QUANT


def _quantize_fused(x_f32):
    """Divide-free fast path (constants folded at trace time).  Last-ulp
    differences vs the literal expression can flip a 1/128 bucket in rare
    boundary cases, so it is opt-in (exact=False)."""
    return jnp.floor(x_f32 * (256.0 / 255.0) - 128.0) * _QUANT


def _make_kernel(exact, out_dtype):
    quant = _quantize_exact if exact else _quantize_fused

    def kernel(x_ref, o_ref):
        # Cast to f32 in VMEM: the narrow (e.g. uint8) input is what streams
        # from HBM, which is the whole bandwidth story for this kernel.
        o_ref[...] = quant(x_ref[...].astype(jnp.float32)).astype(out_dtype)

    return kernel


def _block_cap_bytes():
    """Per-generation output-block cap (coarse; safe fallback is 2 MiB)."""
    try:
        kind = jax.devices()[0].device_kind.lower()
    except Exception:
        kind = ""
    if "v7" in kind:
        return _V7X_BLOCK_BYTES
    return _DEFAULT_BLOCK_BYTES


def _run_slab(slab, exact, out_dtype):
    """Run the elementwise kernel over a (rows, width) lane-dense slab."""
    rows, width = slab.shape
    in_itemsize = jnp.dtype(slab.dtype).itemsize
    out_itemsize = jnp.dtype(out_dtype).itemsize
    # Minimum sublane multiple for the input dtype's packed tiling
    # (f32 -> 8, bf16 -> 16, int8/uint8 -> 32).
    sub_mult = max(8, 32 // max(in_itemsize, 1))

    cap_bytes = _block_cap_bytes()
    br_cap = max(sub_mult,
                 (cap_bytes // (width * out_itemsize)) // sub_mult * sub_mult)

    out_bytes = rows * width * out_itemsize
    if rows > br_cap:
        block_rows = br_cap                       # multiple of sub_mult; tail masked
    elif out_bytes >= _MIN_SPLIT_OUT_BYTES and rows >= 4 * sub_mult:
        # Never run a sizable output as grid=(1,): >= ~4 grid steps keeps
        # double-buffering (overlap) alive and lets the "parallel" axis be
        # sharded across v7x's 2 TensorCores.
        block_rows = max(sub_mult, (rows // 4) // sub_mult * sub_mult)
    else:
        block_rows = rows                         # full extent: always legal

    grid = (pl.cdiv(rows, block_rows),)

    in_block_bytes = block_rows * width * in_itemsize
    out_block_bytes = block_rows * width * out_itemsize
    vmem_limit = None
    if out_block_bytes > _DEFAULT_BLOCK_BYTES:
        # Large-block (v7x) path: size the scoped-VMEM limit explicitly
        # (double-buffered in+out plus headroom).
        vmem_limit = int(2 * (in_block_bytes + out_block_bytes) + (8 << 20))

    n = rows * width
    cost = pl.CostEstimate(flops=5 * n, transcendentals=0,
                           bytes_accessed=n * (in_itemsize + out_itemsize))

    return pl.pallas_call(
        _make_kernel(exact, out_dtype),
        out_shape=jax.ShapeDtypeStruct((rows, width), out_dtype),
        grid=grid,
        in_specs=[pl.BlockSpec((block_rows, width), lambda i: (i, 0))],
        out_specs=pl.BlockSpec((block_rows, width), lambda i: (i, 0)),
        compiler_params=pltpu.CompilerParams(
            dimension_semantics=("parallel",),    # v7x can shard across 2 TCs
            vmem_limit_bytes=vmem_limit,
        ),
        cost_estimate=cost,
    )(slab)


def input_scale(x, *, exact=True, out_dtype=jnp.float32):
    """InputScale forward.  Any shape/dtype in, float32 (default) out.

    Pass raw uint8/int8 pixel tensors when possible: the cast to float32
    happens inside VMEM, so keeping the HBM input narrow cuts read traffic.
    """
    orig_shape = x.shape
    flat = x.reshape(-1)                 # keep original dtype; cast in-kernel
    n_valid = flat.shape[0]
    if n_valid == 0:
        return jnp.zeros(orig_shape, out_dtype)

    # Pick a lane-dense slab width that divides the element count (no pad /
    # extra copy in the common case), preferring widths with >= 8 rows.
    width = None
    for w in (4096, 2048, 1024, 512, 256, _LANE):
        if n_valid % w == 0 and n_valid // w >= 8:
            width = w
            break
    if width is None:
        for w in (4096, 2048, 1024, 512, 256, _LANE):
            if n_valid % w == 0:
                width = w
                break

    if width is not None:
        out = _run_slab(flat.reshape(n_valid // width, width), exact, out_dtype)
        return out.reshape(orig_shape)

    # Ragged size (rare): run the main body unpadded through the kernel and
    # handle the < width tail in plain JAX -- avoids the full-array jnp.pad
    # and out[:n] slice, each of which is a full extra HBM read+write copy.
    width = 1024 if n_valid >= 8 * 1024 else _LANE
    rows = n_valid // width
    main_n = rows * width
    quant = _quantize_exact if exact else _quantize_fused
    tail = quant(flat[main_n:].astype(jnp.float32)).astype(out_dtype)
    if rows == 0:
        # Degenerate (< 128 elements): plain-JAX only, not worth a kernel.
        return tail.reshape(orig_shape)
    main = _run_slab(flat[:main_n].reshape(rows, width), exact, out_dtype)
    return jnp.concatenate([main.reshape(-1), tail]).reshape(orig_shape)


def _reference(x):
    """Pure-JAX literal translation of the PyTorch forward."""
    x32 = x.astype(jnp.float32)
    z = -1.0 + 2.0 * x32 / 255.0
    return z - jnp.remainder(z, _QUANT)


if __name__ == "__main__":
    key = jax.random.PRNGKey(0)
    # NCHW input with pixel-like values in [0, 255].
    x = jax.random.uniform(key, (2, 4, 16, 16), dtype=jnp.float32) * 255.0

    y = jax.block_until_ready(input_scale(x))
    ref = _reference(x)
    assert y.shape == x.shape and y.dtype == jnp.float32
    assert jnp.allclose(y, ref, atol=1e-6), "mismatch vs f32 reference"

    # Narrow-dtype path: raw uint8 pixels, cast to f32 inside the kernel.
    x_u8 = x.astype(jnp.uint8)
    y_u8 = jax.block_until_ready(input_scale(x_u8))
    assert jnp.allclose(y_u8, _reference(x_u8), atol=1e-6), "mismatch (uint8)"

    # Ragged element count: exercises the main-body kernel + tiny JAX tail.
    x_rag = jax.random.uniform(jax.random.PRNGKey(1), (7, 37),
                               dtype=jnp.float32) * 255.0
    y_rag = jax.block_until_ready(input_scale(x_rag))
    assert jnp.allclose(y_rag, _reference(x_rag), atol=1e-6), "mismatch (ragged)"

    print("KERNEL_OK")
</pallas_src>

<mosaic_0001>
module attributes {stable_mosaic.version = 11 : i64} {
  func.func @kernel(%arg0: i32, %arg1: memref<8x256xf32, #tpu.memory_space<vmem>>, %arg2: memref<8x256xf32, #tpu.memory_space<vmem>>) attributes {dimension_semantics = [#tpu.dimension_semantics<parallel>], iteration_bounds = array<i64: 1>, scalar_prefetch = 0 : i64, scratch_operands = 0 : i64, tpu.core_type = #tpu.core_type<tc>, window_params = [{transform_indices = @transform_0, window_bounds = array<i64: 8, 256>}, {transform_indices = @transform_1, window_bounds = array<i64: 8, 256>}]} {
    %c0 = arith.constant 0 : index
    %c0_0 = arith.constant 0 : index
    %0 = vector.load %arg1[%c0, %c0_0] : memref<8x256xf32, #tpu.memory_space<vmem>>, vector<8x256xf32>
    %cst = arith.constant 2.000000e+00 : f32
    %1 = vector.broadcast %cst : f32 to vector<8x256xf32>
    %2 = arith.mulf %1, %0 : vector<8x256xf32>
    %cst_1 = arith.constant 2.550000e+02 : f32
    %3 = vector.broadcast %cst_1 : f32 to vector<8x256xf32>
    %4 = arith.divf %2, %3 : vector<8x256xf32>
    %cst_2 = arith.constant -1.000000e+00 : f32
    %5 = vector.broadcast %cst_2 : f32 to vector<8x256xf32>
    %6 = arith.addf %5, %4 : vector<8x256xf32>
    %cst_3 = arith.constant 1.280000e+02 : f32
    %7 = vector.broadcast %cst_3 : f32 to vector<8x256xf32>
    %8 = arith.mulf %6, %7 : vector<8x256xf32>
    %9 = math.floor %8 : vector<8x256xf32>
    %cst_4 = arith.constant 7.812500e-03 : f32
    %10 = vector.broadcast %cst_4 : f32 to vector<8x256xf32>
    %11 = arith.mulf %9, %10 : vector<8x256xf32>
    %c0_5 = arith.constant 0 : index
    %c0_6 = arith.constant 0 : index
    %12 = vector.load %arg2[%c0_5, %c0_6] : memref<8x256xf32, #tpu.memory_space<vmem>>, vector<8x256xf32>
    tpu.vector_store %arg2[%c0_5, %c0_6], %11 {strides = array<i32>} : memref<8x256xf32, #tpu.memory_space<vmem>>, vector<8x256xf32>,
    return
  }
  func.func @transform_0(%arg0: i32) -> (i32, i32) {
    %c0_i32 = arith.constant 0 : i32
    %c0_i32_0 = arith.constant 0 : i32
    return %arg0, %c0_i32 : i32, i32
  }
  func.func @transform_1(%arg0: i32) -> (i32, i32) {
    %c0_i32 = arith.constant 0 : i32
    %c0_i32_0 = arith.constant 0 : i32
    return %arg0, %c0_i32 : i32, i32
  }
}

</mosaic_0001>

<llo_original>
// kernel: tpu_custom_call.1
$region0: #{tpu_custom_call.1}
  #allocation0 [shape = 'u32[]', space=smem, size = 0x4, offset = 0x4, fixed_abs, tag = 'smem constant byte address 0x4 - core index']
  #allocation1 [shape = 'u32[144,128]{1,0:T(1,128)}', space=vmem, size = 0x12000, scoped, tag = 'internal scratch']
  %s0 = inlined_call_operand.hbm [shape: f32[8,256], index: 0, kind: input, shape index: {}]
  %s1 = inlined_call_operand.hbm [shape: f32[8,256], index: 1, kind: output, shape index: {}]
  %s2 = sld [smem:[#allocation0]]
  $region18: #{tpu_custom_call.1} parent=0
    _
  %s4 = ssub.s32 1, %s2
  %s5 = scalar_select 0, %s4, %s2
  $region1: #{tpu_custom_call.1} parent=0
    #allocation2 [shape = 'u8[8192]{0}', space=vmem, size = 0x2000, scoped, tag = 'input window, operand 0, single buffered']
    #allocation3 [shape = 's32[1]{0}', space=sflag, size = 0x4, scoped, tag = 'scoped memory for tpu_custom_call.1']
    #allocation4 [shape = 's32[1]{0}', space=sflag, size = 0x4, scoped, tag = 'scoped memory for tpu_custom_call.1']
    #allocation5 [shape = 'u8[8192]{0}', space=vmem, size = 0x2000, scoped, tag = 'output window, operand 0, single buffered']
    %6 = vsyncpa [#allocation3], 0
    %7 = vsyncpa [#allocation4], 0
    // Predicated region
    $region2: #{tpu_custom_call.1} parent=1 // pred_check
      _
    $region3: #{tpu_custom_call.1} parent=1 // pred_check_branch
      %9 = sbr.rel (0) target = $region5
    $region4: #{tpu_custom_call.1} parent=1 // pred_region
      %s11 = ssub.s32 256, 256
      %12 = vsyncadd [#allocation3], %s11
      %s14 = sshll.u32 [#allocation2], 4
      %s15 = int_to_ptr.vmem [resolvable:$true] %s14
      %17 = dma.hbm_to_vmem [thread:$0]  %s0, 256, %s15, [#allocation3]
    $region5: #{tpu_custom_call.1} parent=1 // pred_fallthru
      _
    // Predicated region
    $region6: #{tpu_custom_call.1} parent=1 // pred_check
      _
    $region7: #{tpu_custom_call.1} parent=1 // pred_check_branch
      %19 = sbr.rel (0) target = $region9
    $region8: #{tpu_custom_call.1} parent=1 // pred_region
      %20 = dma.done [#allocation3], 256
    $region9: #{tpu_custom_call.1} parent=1 // pred_fallthru
      _
    %v21 = vld [vmem:[#allocation2] sm:$0xff]
    %v22 = vld [vmem:[#allocation2 + $0x8] sm:$0xff]
    %v23 = vmul.f32 %v21, 2.0
    %v24 = vmul.f32 %v22, 2.0
    %v25 = vrcp.pop 255.0
    %v26 = vmul.f32 %v23, %v25
    %v27 = vmul.f32 %v24, %v25
    %v28 = vadd.f32 %v26, -1.0
    %v29 = vadd.f32 %v27, -1.0
    %v30 = vmul.f32 %v28, 128.0
    %v31 = vmul.f32 %v29, 128.0
    %v32 = vfloor.f32 %v30
    %v33 = vfloor.f32 %v31
    %v34 = vmul.f32 %v32, 0.0078125
    %v35 = vmul.f32 %v33, 0.0078125
    %36 = vst [vmem:[#allocation5] sm:$0xff] %v34
    %37 = vst [vmem:[#allocation5 + $0x8] sm:$0xff] %v35
    // Predicated region
    $region10: #{tpu_custom_call.1} parent=1 // pred_check
      _
    $region11: #{tpu_custom_call.1} parent=1 // pred_check_branch
      %39 = sbr.rel (0) target = $region13
    $region12: #{tpu_custom_call.1} parent=1 // pred_region
      %s41 = ssub.s32 256, 256
      %42 = vsyncadd [#allocation4], %s41
      %s44 = sshll.u32 [#allocation5], 4
      %s45 = int_to_ptr.vmem [resolvable:$true] %s44
      %47 = dma.vmem_to_hbm [thread:$0]  %s45, 256, %s1, [#allocation4]
    $region13: #{tpu_custom_call.1} parent=1 // pred_fallthru
      _
    // Predicated region
    $region14: #{tpu_custom_call.1} parent=1 // pred_check
      _
    $region15: #{tpu_custom_call.1} parent=1 // pred_check_branch
      %49 = sbr.rel (0) target = $region17
    $region16: #{tpu_custom_call.1} parent=1 // pred_region
      %50 = dma.done [#allocation4], 256
    $region17: #{tpu_custom_call.1} parent=1 // pred_fallthru
      _
    %51 = vsyncpa [#allocation3], 1
    %52 = vsyncpa [#allocation4], 1

</llo_original>
